<compile_context>
chip_gen: v7x
topology: tpu7x:2x2x1
jax: 0.10.0
libtpu: 0.0.40
codegen_flags: <defaults>
</compile_context>

<pallas_src>
import numpy as np
import jax
import jax.numpy as jnp
from jax import lax
from jax.experimental import pallas as pl
from jax.experimental.pallas import tpu as pltpu

EPSILON = float(np.finfo(np.float32).eps)   # == torch.finfo(torch.float32).eps


def _round_up(x, m):
    return ((x + m - 1) // m) * m


def _pad2(a, rows, cols):
    return jnp.pad(a, ((0, rows - a.shape[0]), (0, cols - a.shape[1])))


def _make_super_layer_kernel(l1, l2, n_real, inv_s1, inv_s2, eps):
    """Kernel with scalar hyper-parameters baked in as Python floats."""
    l1 = float(l1)
    l2n = float(l2) * float(n_real)          # l2 * (Jm @ J.T) == l2 * N everywhere
    inv_s1 = float(inv_s1)
    inv_s2 = float(inv_s2)
    n_real = int(n_real)
    eps = float(eps)

    def kernel(rowf_ref, colf_ref, xt_ref, vt_tile_ref, vt_full_ref, b_ref, m_ref,
               vt_out_ref, a_ref, dsum_ref):
        f32 = jnp.float32

        # ---------------- affinity tile A (fused with its consumers) ----------------
        rowf = rowf_ref[...]                  # (TN, 3)   [x, y, group]
        colf = colf_ref[...]                  # (3, Npad) [x; y; group]
        x_d = rowf[:, 0:1] - colf[0:1, :]     # (TN, Npad)
        y_d = rowf[:, 1:2] - colf[1:2, :]
        t_dis = x_d * x_d + y_d * y_d         # |.|^2 == square; abs dropped
        # I is one-hot over groups: z = sum_g |I_gi - I_gj| = 2*(1 - same), so z^2 = 4*(1-same)
        diff_grp = (rowf[:, 2:3] != colf[2:3, :]).astype(f32)
        A = jnp.exp(-(t_dis * inv_s1 + (4.0 * inv_s2) * diff_grp))

        # zero out padded columns so the degree row-sum and A @ V.T stay exact
        if A.shape[1] > n_real:
            col_id = lax.broadcasted_iota(jnp.int32, A.shape, 1)
            A = jnp.where(col_id < n_real, A, 0.0)

        a_ref[...] = A                                        # single HBM writeback of A
        dsum = jnp.sum(A, axis=1, keepdims=True)              # diag(D) for this row tile
        dsum_ref[...] = dsum

        # ---------------- multiplicative V update for this row tile -----------------
        XT = xt_ref[...]            # (TN, D)
        VT = vt_tile_ref[...]       # (TN, Kp)   = V.T row tile
        VT_full = vt_full_ref[...]  # (Npad, Kp) = full V.T (contraction operand)
        B = b_ref[...]              # (D, Kp)
        M = m_ref[...]              # (Kp, Kp) = B.T B + 2*l3*W.T W (precomputed)

        def dg(a, b, ca, cb):
            return lax.dot_general(a, b, (((ca,), (cb,)), ((), ())),
                                   preferred_element_type=f32)

        # numerator = X.T @ B + l1 * A @ V.T + l2 * (Jm @ J.T)  [ones product == l2*N]
        num = dg(XT, B, 1, 0) + l1 * dg(A, VT_full, 1, 0) + l2n

        # denominator = V.T @ (B.T B + 2 l3 W.T W)          (reassociated Gram form)
        #             + l1 * (D @ V.T)       == l1 * dsum (*) V.T
        #             + l2 * (V.T @ J) @ J.T == l2 * N * rowsum_K(V.T)
        #             + eps
        row_sum_v = jnp.sum(VT, axis=1, keepdims=True)        # (TN, 1)
        den = dg(VT, M, 1, 0) + l1 * (dsum * VT) + l2n * row_sum_v + eps

        v_new = VT * (num / den)
        v_new = jnp.where(v_new < 0.001, 0.0, v_new)
        # per-sample normalization (sum over components); matches reference semantics
        # TODO(synk): reference divides by an unguarded sum -> NaN if a whole sample
        #             falls below the threshold; kept identical on purpose.
        col_sum = jnp.sum(v_new, axis=1, keepdims=True)
        vt_out_ref[...] = v_new / col_sum

    return kernel


def super_layer_forward(X, V, W1, W2, W3, locs, I, B, L1, L2, L3, S1, S2):
    """JAX/Pallas equivalent of SuperLayer.forward. Returns (V, D, A, J, Jm, W)."""
    f32 = jnp.float32
    X = X.astype(f32)
    V = V.astype(f32)
    B = B.astype(f32)
    I = I.astype(f32)
    locs = locs.astype(f32)

    Dfeat, N = X.shape
    K = B.shape[1]

    # ---- plain-JAX glue: data-dependent W gather + tiny constant (K,K) Gram matrix ----
    stack = jnp.stack([W1, W2, W3]).astype(f32)        # (3, 1, K)
    gidx = jnp.argmax(I.T, axis=1)                     # (N,)
    W = jnp.squeeze(stack[gidx])                       # (N, K)
    M = B.T @ B + 2.0 * float(L3) * (W.T @ W)          # constant across all samples

    # ---- padding: lane-dense K, sublane-aligned row tiles over samples ----
    k_pad = _round_up(max(K, 1), 128)
    if N <= 256:
        tile_n = _round_up(N, 8)
        n_pad = tile_n
    else:
        tile_n = 256
        n_pad = _round_up(N, tile_n)

    XT_p = _pad2(X.T, n_pad, Dfeat)                    # (n_pad, D)
    VT_p = _pad2(V.T, n_pad, k_pad)                    # (n_pad, k_pad), zero padded
    B_p = _pad2(B, Dfeat, k_pad)                       # (D, k_pad)
    M_p = _pad2(M, k_pad, k_pad)                       # (k_pad, k_pad)
    rowf = jnp.concatenate([locs, gidx.astype(f32)[:, None]], axis=1)   # (N, 3)
    rowf_p = _pad2(rowf, n_pad, 3)                     # (n_pad, 3)
    colf_p = rowf_p.T                                  # (3, n_pad)

    kernel = _make_super_layer_kernel(
        L1, L2, N,
        1.0 / (float(S1) ** 2 + EPSILON),
        1.0 / (float(S2) ** 2 + EPSILON),
        EPSILON)

    grid = (n_pad // tile_n,)
    out_shape = (
        jax.ShapeDtypeStruct((n_pad, k_pad), f32),     # updated V.T (padded)
        jax.ShapeDtypeStruct((n_pad, n_pad), f32),     # A (padded)
        jax.ShapeDtypeStruct((n_pad, 1), f32),         # diag(D) (padded)
    )
    in_specs = [
        pl.BlockSpec((tile_n, 3), lambda i: (i, 0)),       # row feats [x, y, group]
        pl.BlockSpec((3, n_pad), lambda i: (0, 0)),        # col feats (resident)
        pl.BlockSpec((tile_n, Dfeat), lambda i: (i, 0)),   # X.T row tile
        pl.BlockSpec((tile_n, k_pad), lambda i: (i, 0)),   # V.T row tile
        pl.BlockSpec((n_pad, k_pad), lambda i: (0, 0)),    # V.T full (A @ V.T contraction)
        pl.BlockSpec((Dfeat, k_pad), lambda i: (0, 0)),    # B
        pl.BlockSpec((k_pad, k_pad), lambda i: (0, 0)),    # B.T B + 2 l3 W.T W
    ]
    out_specs = (
        pl.BlockSpec((tile_n, k_pad), lambda i: (i, 0)),
        pl.BlockSpec((tile_n, n_pad), lambda i: (i, 0)),
        pl.BlockSpec((tile_n, 1), lambda i: (i, 0)),
    )

    vt_new_p, A_p, dsum_p = pl.pallas_call(
        kernel,
        out_shape=out_shape,
        grid=grid,
        in_specs=in_specs,
        out_specs=out_specs,
        compiler_params=pltpu.CompilerParams(
            dimension_semantics=("parallel",)),          # row tiles shard across TCs (v7x)
    )(rowf_p, colf_p, XT_p, VT_p, VT_p, B_p, M_p)

    V_new = vt_new_p[:N, :K].T                           # (K, N)
    A = A_p[:N, :N]
    Dmat = jnp.diag(dsum_p[:N, 0])                       # dense diag only in the wrapper
    J = jnp.ones((K, N), f32)
    Jm = jnp.ones((N, N), f32)
    return V_new, Dmat, A, J, Jm, W


def _reference_forward(X, V, W1, W2, W3, locs, I, B, L1, L2, L3, S1, S2):
    """Pure-numpy (float64) reference replicating the PyTorch forward."""
    X = np.asarray(X, np.float64); V = np.asarray(V, np.float64)
    B = np.asarray(B, np.float64); I = np.asarray(I, np.float64)
    locs = np.asarray(locs, np.float64)
    stack = np.stack([np.asarray(W1, np.float64),
                      np.asarray(W2, np.float64),
                      np.asarray(W3, np.float64)])
    idx = np.argmax(I.T, axis=1)
    W = np.squeeze(stack[idx])
    x_difs = locs[:, 0][:, None] - locs[:, 0][None, :]
    y_difs = locs[:, 1][:, None] - locs[:, 1][None, :]
    t_dis = np.abs(x_difs) ** 2 + np.abs(y_difs) ** 2
    z_difs = np.sum(np.abs(I[:, :, None] - I[:, None, :]), axis=0)
    A = np.exp(-(t_dis / (S1 ** 2 + EPSILON) + z_difs ** 2 / (S2 ** 2 + EPSILON)))
    Dm = np.diag(A.sum(axis=1))
    N = X.shape[1]; K = B.shape[1]
    Jm = np.ones((N, N)); J = np.ones((K, N)); E = np.ones((N, K)) * EPSILON
    num = X.T @ B + L1 * (A @ V.T) + L2 * (Jm @ J.T)
    den = (V.T @ B.T) @ B + L1 * (Dm @ V.T) + L2 * ((V.T @ J) @ J.T) + E \
        + 2 * L3 * (V.T @ (W.T @ W))
    delta = num / den
    Vn = (V.T * delta).T
    Vn[Vn < 0.001] = 0
    Vn = Vn / Vn.sum(axis=0)
    return Vn, Dm, A, W


if __name__ == "__main__":
    key = jax.random.PRNGKey(0)
    N, Dfeat, K, G = 8, 16, 4, 3          # samples, features, components, groups
    ks = jax.random.split(key, 8)

    X = jax.random.uniform(ks[0], (Dfeat, N), jnp.float32)
    V = jax.random.uniform(ks[1], (K, N), jnp.float32, minval=0.5, maxval=1.5)
    B = jax.random.uniform(ks[2], (Dfeat, K), jnp.float32)
    W1 = jax.random.uniform(ks[3], (1, K), jnp.float32)
    W2 = jax.random.uniform(ks[4], (1, K), jnp.float32)
    W3 = jax.random.uniform(ks[5], (1, K), jnp.float32)
    locs = jax.random.uniform(ks[6], (N, 2), jnp.float32, minval=0.0, maxval=10.0)
    group = jax.random.randint(ks[7], (N,), 0, G)
    I = jnp.transpose(jax.nn.one_hot(group, G, dtype=jnp.float32))   # (G, N)

    L1, L2, L3, S1, S2 = 0.1, 0.05, 0.01, 2.0, 1.0

    V_new, Dmat, A, J, Jm, W = super_layer_forward(
        X, V, W1, W2, W3, locs, I, B, L1, L2, L3, S1, S2)
    jax.block_until_ready((V_new, Dmat, A, J, Jm, W))

    # Validate against a pure-numpy reference of the PyTorch forward.
    ref_V, ref_D, ref_A, ref_W = _reference_forward(
        X, V, W1, W2, W3, locs, I, B, L1, L2, L3, S1, S2)

    assert V_new.shape == (K, N) and Dmat.shape == (N, N) and A.shape == (N, N)
    assert J.shape == (K, N) and Jm.shape == (N, N) and W.shape == (N, K)
    assert np.all(np.isfinite(np.asarray(V_new)))
    assert np.allclose(np.asarray(A), ref_A, rtol=1e-3, atol=1e-5)
    assert np.allclose(np.asarray(Dmat), ref_D, rtol=1e-3, atol=1e-5)
    assert np.allclose(np.asarray(W), ref_W, rtol=1e-5, atol=1e-6)
    assert np.allclose(np.asarray(V_new), ref_V, rtol=2e-2, atol=1e-4)
    # normalized columns should sum to 1
    assert np.allclose(np.asarray(V_new).sum(axis=0), 1.0, rtol=1e-4, atol=1e-4)

    print("KERNEL_OK")
</pallas_src>

<mosaic_0001>
module attributes {stable_mosaic.version = 11 : i64} {
  func.func @kernel(%arg0: i32, %arg1: memref<8x3xf32, #tpu.memory_space<vmem>>, %arg2: memref<3x8xf32, #tpu.memory_space<vmem>>, %arg3: memref<8x16xf32, #tpu.memory_space<vmem>>, %arg4: memref<8x128xf32, #tpu.memory_space<vmem>>, %arg5: memref<8x128xf32, #tpu.memory_space<vmem>>, %arg6: memref<16x128xf32, #tpu.memory_space<vmem>>, %arg7: memref<128x128xf32, #tpu.memory_space<vmem>>, %arg8: memref<8x128xf32, #tpu.memory_space<vmem>>, %arg9: memref<8x8xf32, #tpu.memory_space<vmem>>, %arg10: memref<8x1xf32, #tpu.memory_space<vmem>>) attributes {dimension_semantics = [#tpu.dimension_semantics<parallel>], iteration_bounds = array<i64: 1>, scalar_prefetch = 0 : i64, scratch_operands = 0 : i64, tpu.core_type = #tpu.core_type<tc>, window_params = [{transform_indices = @transform_0, window_bounds = array<i64: 8, 3>}, {pipeline_mode = #tpu.pipeline_mode<synchronous>, transform_indices = @transform_1, window_bounds = array<i64: 3, 8>}, {transform_indices = @transform_2, window_bounds = array<i64: 8, 16>}, {transform_indices = @transform_3, window_bounds = array<i64: 8, 128>}, {pipeline_mode = #tpu.pipeline_mode<synchronous>, transform_indices = @transform_4, window_bounds = array<i64: 8, 128>}, {pipeline_mode = #tpu.pipeline_mode<synchronous>, transform_indices = @transform_5, window_bounds = array<i64: 16, 128>}, {pipeline_mode = #tpu.pipeline_mode<synchronous>, transform_indices = @transform_6, window_bounds = array<i64: 128, 128>}, {transform_indices = @transform_7, window_bounds = array<i64: 8, 128>}, {transform_indices = @transform_8, window_bounds = array<i64: 8, 8>}, {transform_indices = @transform_9, window_bounds = array<i64: 8, 1>}]} {
    %c0 = arith.constant 0 : index
    %c0_0 = arith.constant 0 : index
    %0 = vector.load %arg1[%c0, %c0_0] : memref<8x3xf32, #tpu.memory_space<vmem>>, vector<8x3xf32>
    %c0_1 = arith.constant 0 : index
    %c0_2 = arith.constant 0 : index
    %1 = vector.load %arg2[%c0_1, %c0_2] : memref<3x8xf32, #tpu.memory_space<vmem>>, vector<3x8xf32>
    %2 = vector.extract_strided_slice %0 {offsets = [0, 0], sizes = [8, 1], strides = [1, 1]} : vector<8x3xf32> to vector<8x1xf32>
    %3 = vector.extract_strided_slice %1 {offsets = [0, 0], sizes = [1, 8], strides = [1, 1]} : vector<3x8xf32> to vector<1x8xf32>
    %4 = vector.broadcast %2 : vector<8x1xf32> to vector<8x8xf32>
    %5 = vector.broadcast %3 : vector<1x8xf32> to vector<8x8xf32>
    %6 = arith.subf %4, %5 : vector<8x8xf32>
    %7 = vector.extract_strided_slice %0 {offsets = [0, 1], sizes = [8, 1], strides = [1, 1]} : vector<8x3xf32> to vector<8x1xf32>
    %8 = vector.extract_strided_slice %1 {offsets = [1, 0], sizes = [1, 8], strides = [1, 1]} : vector<3x8xf32> to vector<1x8xf32>
    %9 = vector.broadcast %7 : vector<8x1xf32> to vector<8x8xf32>
    %10 = vector.broadcast %8 : vector<1x8xf32> to vector<8x8xf32>
    %11 = arith.subf %9, %10 : vector<8x8xf32>
    %12 = arith.mulf %6, %6 : vector<8x8xf32>
    %13 = arith.mulf %11, %11 : vector<8x8xf32>
    %14 = arith.addf %12, %13 : vector<8x8xf32>
    %15 = vector.extract_strided_slice %0 {offsets = [0, 2], sizes = [8, 1], strides = [1, 1]} : vector<8x3xf32> to vector<8x1xf32>
    %16 = vector.extract_strided_slice %1 {offsets = [2, 0], sizes = [1, 8], strides = [1, 1]} : vector<3x8xf32> to vector<1x8xf32>
    %17 = vector.broadcast %15 : vector<8x1xf32> to vector<8x8xf32>
    %18 = vector.broadcast %16 : vector<1x8xf32> to vector<8x8xf32>
    %19 = arith.cmpf one, %17, %18 : vector<8x8xf32>
    %20 = arith.extui %19 : vector<8x8xi1> to vector<8x8xi32>
    %21 = arith.sitofp %20 : vector<8x8xi32> to vector<8x8xf32>
    %cst = arith.constant 2.500000e-01 : f32
    %22 = vector.broadcast %cst : f32 to vector<8x8xf32>
    %23 = arith.mulf %14, %22 : vector<8x8xf32>
    %cst_3 = arith.constant 3.99999952 : f32
    %24 = vector.broadcast %cst_3 : f32 to vector<8x8xf32>
    %25 = arith.mulf %24, %21 : vector<8x8xf32>
    %26 = arith.addf %23, %25 : vector<8x8xf32>
    %cst_4 = arith.constant 0.000000e+00 : f32
    %27 = vector.broadcast %cst_4 : f32 to vector<8x8xf32>
    %28 = arith.subf %27, %26 : vector<8x8xf32>
    %29 = math.exp %28 : vector<8x8xf32>
    %c0_5 = arith.constant 0 : index
    %c0_6 = arith.constant 0 : index
    %30 = vector.load %arg9[%c0_5, %c0_6] : memref<8x8xf32, #tpu.memory_space<vmem>>, vector<8x8xf32>
    tpu.vector_store %arg9[%c0_5, %c0_6], %29 {strides = array<i32>} : memref<8x8xf32, #tpu.memory_space<vmem>>, vector<8x8xf32>,
    %cst_7 = arith.constant dense<0.000000e+00> : vector<8xf32>
    %31 = vector.multi_reduction <add>, %29, %cst_7 [1] : vector<8x8xf32> to vector<8xf32>
    %32 = vector.shape_cast %31 : vector<8xf32> to vector<8x1xf32>
    %c0_8 = arith.constant 0 : index
    %c0_9 = arith.constant 0 : index
    %33 = vector.load %arg10[%c0_8, %c0_9] : memref<8x1xf32, #tpu.memory_space<vmem>>, vector<8x1xf32>
    tpu.vector_store %arg10[%c0_8, %c0_9], %32 {strides = array<i32>} : memref<8x1xf32, #tpu.memory_space<vmem>>, vector<8x1xf32>,
    %c0_10 = arith.constant 0 : index
    %c0_11 = arith.constant 0 : index
    %34 = vector.load %arg3[%c0_10, %c0_11] : memref<8x16xf32, #tpu.memory_space<vmem>>, vector<8x16xf32>
    %c0_12 = arith.constant 0 : index
    %c0_13 = arith.constant 0 : index
    %35 = vector.load %arg4[%c0_12, %c0_13] : memref<8x128xf32, #tpu.memory_space<vmem>>, vector<8x128xf32>
    %c0_14 = arith.constant 0 : index
    %c0_15 = arith.constant 0 : index
    %36 = vector.load %arg5[%c0_14, %c0_15] : memref<8x128xf32, #tpu.memory_space<vmem>>, vector<8x128xf32>
    %c0_16 = arith.constant 0 : index
    %c0_17 = arith.constant 0 : index
    %37 = vector.load %arg6[%c0_16, %c0_17] : memref<16x128xf32, #tpu.memory_space<vmem>>, vector<16x128xf32>
    %c0_18 = arith.constant 0 : index
    %c0_19 = arith.constant 0 : index
    %38 = vector.load %arg7[%c0_18, %c0_19] : memref<128x128xf32, #tpu.memory_space<vmem>>, vector<128x128xf32>
    %cst_20 = arith.constant dense<0.000000e+00> : vector<8x128xf32>
    %39 = tpu.matmul %34, %37, %cst_20 {dimension_numbers = #tpu.dot_dimension_numbers<[1], [0], [0], [1], [0, 0, 1, 1], [], []>} : vector<8x16xf32>, vector<16x128xf32>, vector<8x128xf32> -> vector<8x128xf32>
    %cst_21 = arith.constant dense<0.000000e+00> : vector<8x128xf32>
    %40 = tpu.matmul %29, %36, %cst_21 {dimension_numbers = #tpu.dot_dimension_numbers<[1], [0], [0], [1], [0, 0, 1, 1], [], []>} : vector<8x8xf32>, vector<8x128xf32>, vector<8x128xf32> -> vector<8x128xf32>
    %cst_22 = arith.constant 1.000000e-01 : f32
    %41 = vector.broadcast %cst_22 : f32 to vector<8x128xf32>
    %42 = arith.mulf %41, %40 : vector<8x128xf32>
    %43 = arith.addf %39, %42 : vector<8x128xf32>
    %cst_23 = arith.constant 4.000000e-01 : f32
    %44 = vector.broadcast %cst_23 : f32 to vector<8x128xf32>
    %45 = arith.addf %43, %44 : vector<8x128xf32>
    %cst_24 = arith.constant dense<0.000000e+00> : vector<8xf32>
    %46 = vector.multi_reduction <add>, %35, %cst_24 [1] : vector<8x128xf32> to vector<8xf32>
    %47 = vector.shape_cast %46 : vector<8xf32> to vector<8x1xf32>
    %cst_25 = arith.constant dense<0.000000e+00> : vector<8x128xf32>
    %48 = tpu.matmul %35, %38, %cst_25 {dimension_numbers = #tpu.dot_dimension_numbers<[1], [0], [0], [1], [0, 0, 1, 1], [], []>} : vector<8x128xf32>, vector<128x128xf32>, vector<8x128xf32> -> vector<8x128xf32>
    %49 = vector.broadcast %32 : vector<8x1xf32> to vector<8x128xf32>
    %50 = arith.mulf %49, %35 : vector<8x128xf32>
    %cst_26 = arith.constant 1.000000e-01 : f32
    %51 = vector.broadcast %cst_26 : f32 to vector<8x128xf32>
    %52 = arith.mulf %51, %50 : vector<8x128xf32>
    %53 = arith.addf %48, %52 : vector<8x128xf32>
    %cst_27 = arith.constant 4.000000e-01 : f32
    %54 = vector.broadcast %cst_27 : f32 to vector<8x1xf32>
    %55 = arith.mulf %54, %47 : vector<8x1xf32>
    %56 = vector.broadcast %55 : vector<8x1xf32> to vector<8x128xf32>
    %57 = arith.addf %53, %56 : vector<8x128xf32>
    %cst_28 = arith.constant 1.1920929E-7 : f32
    %58 = vector.broadcast %cst_28 : f32 to vector<8x128xf32>
    %59 = arith.addf %57, %58 : vector<8x128xf32>
    %60 = arith.divf %45, %59 : vector<8x128xf32>
    %61 = arith.mulf %35, %60 : vector<8x128xf32>
    %cst_29 = arith.constant 1.000000e-03 : f32
    %62 = vector.broadcast %cst_29 : f32 to vector<8x128xf32>
    %63 = arith.cmpf olt, %61, %62 : vector<8x128xf32>
    %cst_30 = arith.constant 0.000000e+00 : f32
    %64 = vector.broadcast %cst_30 : f32 to vector<8x128xf32>
    %65 = arith.select %63, %64, %61 : vector<8x128xi1>, vector<8x128xf32>
    %cst_31 = arith.constant dense<0.000000e+00> : vector<8xf32>
    %66 = vector.multi_reduction <add>, %65, %cst_31 [1] : vector<8x128xf32> to vector<8xf32>
    %67 = vector.shape_cast %66 : vector<8xf32> to vector<8x1xf32>
    %68 = vector.broadcast %67 : vector<8x1xf32> to vector<8x128xf32>
    %69 = arith.divf %65, %68 : vector<8x128xf32>
    %c0_32 = arith.constant 0 : index
    %c0_33 = arith.constant 0 : index
    %70 = vector.load %arg8[%c0_32, %c0_33] : memref<8x128xf32, #tpu.memory_space<vmem>>, vector<8x128xf32>
    tpu.vector_store %arg8[%c0_32, %c0_33], %69 {strides = array<i32>} : memref<8x128xf32, #tpu.memory_space<vmem>>, vector<8x128xf32>,
    return
  }
  func.func @transform_0(%arg0: i32) -> (i32, i32) {
    %c0_i32 = arith.constant 0 : i32
    %c0_i32_0 = arith.constant 0 : i32
    return %arg0, %c0_i32 : i32, i32
  }
  func.func @transform_1(%arg0: i32) -> (i32, i32) {
    %c0_i32 = arith.constant 0 : i32
    %c0_i32_0 = arith.constant 0 : i32
    %c0_i32_1 = arith.constant 0 : i32
    return %c0_i32, %c0_i32_0 : i32, i32
  }
  func.func @transform_2(%arg0: i32) -> (i32, i32) {
    %c0_i32 = arith.constant 0 : i32
    %c0_i32_0 = arith.constant 0 : i32
    return %arg0, %c0_i32 : i32, i32
  }
  func.func @transform_3(%arg0: i32) -> (i32, i32) {
    %c0_i32 = arith.constant 0 : i32
    %c0_i32_0 = arith.constant 0 : i32
    return %arg0, %c0_i32 : i32, i32
  }
  func.func @transform_4(%arg0: i32) -> (i32, i32) {
    %c0_i32 = arith.constant 0 : i32
    %c0_i32_0 = arith.constant 0 : i32
    %c0_i32_1 = arith.constant 0 : i32
    return %c0_i32, %c0_i32_0 : i32, i32
  }
  func.func @transform_5(%arg0: i32) -> (i32, i32) {
    %c0_i32 = arith.constant 0 : i32
    %c0_i32_0 = arith.constant 0 : i32
    %c0_i32_1 = arith.constant 0 : i32
    return %c0_i32, %c0_i32_0 : i32, i32
  }
  func.func @transform_6(%arg0: i32) -> (i32, i32) {
    %c0_i32 = arith.constant 0 : i32
    %c0_i32_0 = arith.constant 0 : i32
    %c0_i32_1 = arith.constant 0 : i32
    return %c0_i32, %c0_i32_0 : i32, i32
  }
  func.func @transform_7(%arg0: i32) -> (i32, i32) {
    %c0_i32 = arith.constant 0 : i32
    %c0_i32_0 = arith.constant 0 : i32
    return %arg0, %c0_i32 : i32, i32
  }
  func.func @transform_8(%arg0: i32) -> (i32, i32) {
    %c0_i32 = arith.constant 0 : i32
    %c0_i32_0 = arith.constant 0 : i32
    return %arg0, %c0_i32 : i32, i32
  }
  func.func @transform_9(%arg0: i32) -> (i32, i32) {
    %c0_i32 = arith.constant 0 : i32
    %c0_i32_0 = arith.constant 0 : i32
    return %arg0, %c0_i32 : i32, i32
  }
}

</mosaic_0001>

<llo_original>
// kernel: tpu_custom_call.1
$region0: #{tpu_custom_call.1}
  #allocation0 [shape = 'u32[]', space=smem, size = 0x4, offset = 0x4, fixed_abs, tag = 'smem constant byte address 0x4 - core index']
  #allocation1 [shape = 'u32[144,128]{1,0:T(1,128)}', space=vmem, size = 0x12000, scoped, tag = 'internal scratch']
  %s0 = inlined_call_operand.vmem [shape: f32[8,3], index: 0, kind: input, shape index: {}]
  %s1 = inlined_call_operand.vmem [shape: f32[3,8], index: 1, kind: input, shape index: {}]
  %s2 = inlined_call_operand.vmem [shape: f32[8,16], index: 2, kind: input, shape index: {}]
  %s3 = inlined_call_operand.hbm [shape: f32[8,128], index: 3, kind: input, shape index: {}]
  %s4 = inlined_call_operand.hbm [shape: f32[8,128], index: 4, kind: input, shape index: {}]
  %s5 = inlined_call_operand.vmem [shape: f32[16,128], index: 5, kind: input, shape index: {}]
  %s6 = inlined_call_operand.hbm [shape: f32[128,128], index: 6, kind: input, shape index: {}]
  %s7 = inlined_call_operand.hbm [shape: f32[8,128], index: 7, kind: output, shape index: {0}]
  %s8 = inlined_call_operand.hbm [shape: f32[8,8], index: 8, kind: output, shape index: {1}]
  %s9 = inlined_call_operand.vmem [shape: f32[8,1], index: 9, kind: output, shape index: {2}]
  %10 = xla_tuple %s7, %s8, %s9
  %s11 = sld [smem:[#allocation0]]
  $region66: #{tpu_custom_call.1} parent=0
    _
  %s13 = ssub.s32 1, %s11
  %s14 = scalar_select 0, %s13, %s11
  $region1: #{tpu_custom_call.1} parent=0
    #allocation2 [shape = 'u8[4096]{0}', space=vmem, size = 0x1000, scoped, tag = 'input window, operand 3, single buffered']
    #allocation3 [shape = 's32[1]{0}', space=sflag, size = 0x4, scoped, tag = 'scoped memory for tpu_custom_call.1']
    #allocation4 [shape = 's32[1]{0}', space=sflag, size = 0x4, scoped, tag = 'scoped memory for tpu_custom_call.1']
    #allocation5 [shape = 'u8[4096]{0}', space=vmem, size = 0x1000, scoped, tag = 'input window, operand 4, single buffered']
    #allocation6 [shape = 's32[1]{0}', space=sflag, size = 0x4, scoped, tag = 'scoped memory for tpu_custom_call.1']
    #allocation7 [shape = 'u8[65536]{0}', space=vmem, size = 0x10000, scoped, tag = 'input window, operand 6, single buffered']
    #allocation8 [shape = 'u8[4096]{0}', space=vmem, size = 0x1000, scoped, tag = 'output window, operand 0, single buffered']
    #allocation9 [shape = 'u8[4096]{0}', space=vmem, size = 0x1000, scoped, tag = 'output window, operand 1, single buffered']
    #allocation10 [shape = 's32[1]{0}', space=sflag, size = 0x4, scoped, tag = 'scoped memory for tpu_custom_call.1']
    %15 = vsyncpa [#allocation3], 0
    %16 = vsyncpa [#allocation6], 0
    %17 = vsyncpa [#allocation4], 0
    %18 = vsyncpa [#allocation10], 0
    // Predicated region
    $region2: #{tpu_custom_call.1} parent=1 // pred_check
      _
    $region3: #{tpu_custom_call.1} parent=1 // pred_check_branch
      %20 = sbr.rel (0) target = $region5
    $region4: #{tpu_custom_call.1} parent=1 // pred_region
      _
    $region5: #{tpu_custom_call.1} parent=1 // pred_fallthru
      _
    // Predicated region
    $region6: #{tpu_custom_call.1} parent=1 // pred_check
      _
    $region7: #{tpu_custom_call.1} parent=1 // pred_check_branch
      %22 = sbr.rel (0) target = $region9
    $region8: #{tpu_custom_call.1} parent=1 // pred_region
      _
    $region9: #{tpu_custom_call.1} parent=1 // pred_fallthru
      _
    // Predicated region
    $region10: #{tpu_custom_call.1} parent=1 // pred_check
      _
    $region11: #{tpu_custom_call.1} parent=1 // pred_check_branch
      %24 = sbr.rel (0) target = $region13
    $region12: #{tpu_custom_call.1} parent=1 // pred_region
      _
    $region13: #{tpu_custom_call.1} parent=1 // pred_fallthru
      _
    // Predicated region
    $region14: #{tpu_custom_call.1} parent=1 // pred_check
      _
    $region15: #{tpu_custom_call.1} parent=1 // pred_check_branch
      %26 = sbr.rel (0) target = $region17
    $region16: #{tpu_custom_call.1} parent=1 // pred_region
      %s28 = ssub.s32 128, 128
      %29 = vsyncadd [#allocation3], %s28
      %s31 = sshll.u32 [#allocation2], 4
      %s32 = int_to_ptr.vmem [resolvable:$true] %s31
      %34 = dma.hbm_to_vmem [thread:$0]  %s3, 128, %s32, [#allocation3]
    $region17: #{tpu_custom_call.1} parent=1 // pred_fallthru
      _
    // Predicated region
    $region18: #{tpu_custom_call.1} parent=1 // pred_check
      _
    $region19: #{tpu_custom_call.1} parent=1 // pred_check_branch
      %36 = sbr.rel (0) target = $region21
    $region20: #{tpu_custom_call.1} parent=1 // pred_region
      %s38 = ssub.s32 128, 128
      %39 = vsyncadd [#allocation6], %s38
      %s41 = sshll.u32 [#allocation5], 4
      %s42 = int_to_ptr.vmem [resolvable:$true] %s41
      %44 = dma.hbm_to_vmem [thread:$0]  %s4, 128, %s42, [#allocation6]
    $region21: #{tpu_custom_call.1} parent=1 // pred_fallthru
      _
    // Predicated region
    $region22: #{tpu_custom_call.1} parent=1 // pred_check
      _
    $region23: #{tpu_custom_call.1} parent=1 // pred_check_branch
      %46 = sbr.rel (0) target = $region25
    $region24: #{tpu_custom_call.1} parent=1 // pred_region
      _
    $region25: #{tpu_custom_call.1} parent=1 // pred_fallthru
      _
    // Predicated region
    $region26: #{tpu_custom_call.1} parent=1 // pred_check
      _
    $region27: #{tpu_custom_call.1} parent=1 // pred_check_branch
      %48 = sbr.rel (0) target = $region29
    $region28: #{tpu_custom_call.1} parent=1 // pred_region
      %s50 = ssub.s32 2048, 2048
      %51 = vsyncadd [#allocation6], %s50
      %s52 = sshll.u32 [#allocation7], 4
      %s53 = int_to_ptr.vmem [resolvable:$true] %s52
      %58 = dma.hbm_to_vmem [thread:$0]  %s6, 2048, %s53, [#allocation6], 128, 128, 8
    $region29: #{tpu_custom_call.1} parent=1 // pred_fallthru
      _
    // Predicated region
    $region30: #{tpu_custom_call.1} parent=1 // pred_check
      _
    $region31: #{tpu_custom_call.1} parent=1 // pred_check_branch
      %60 = sbr.rel (0) target = $region33
    $region32: #{tpu_custom_call.1} parent=1 // pred_region
      %61 = dma.done [#allocation3], 128
    $region33: #{tpu_custom_call.1} parent=1 // pred_fallthru
      _
    // Predicated region
    $region34: #{tpu_custom_call.1} parent=1 // pred_check
      _
    $region35: #{tpu_custom_call.1} parent=1 // pred_check_branch
      %63 = sbr.rel (0) target = $region37
    $region36: #{tpu_custom_call.1} parent=1 // pred_region
      %64 = dma.done [#allocation6], 128
    $region37: #{tpu_custom_call.1} parent=1 // pred_fallthru
      _
    // Predicated region
    $region38: #{tpu_custom_call.1} parent=1 // pred_check
      _
    $region39: #{tpu_custom_call.1} parent=1 // pred_check_branch
      %66 = sbr.rel (0) target = $region41
    $region40: #{tpu_custom_call.1} parent=1 // pred_region
      %67 = dma.done [#allocation6], 2048
    $region41: #{tpu_custom_call.1} parent=1 // pred_fallthru
      _
    %v68 = vld [vmem:[%s0] sm:$0xff]
    %v69 = vld [vmem:[%s1] sm:$0x7]
    %71 = vset.pattern.permute.xlu0 0
    %72 = vperm.xlu0 %71, %v68
    %v73 = vpop.permute.xlu0 %72
    %v75 = vlaneseq
    %v76 = vshrl.u32 %v75, 7
    %v77 = vsub.s32 0, %v76
    %v78 = vrot.slane %v69, %v77
    %v79 = vsub.f32 %v73, %v78
    %80 = vset.pattern.permute.xlu0 1
    %81 = vperm.xlu0 %80, %v68
    %v82 = vpop.permute.xlu0 %81
    %v84 = vlaneseq
    %v85 = vshrl.u32 %v84, 7
    %v86 = vsub.s32 1, %v85
    %v87 = vrot.slane %v69, %v86
    %v88 = vsub.f32 %v82, %v87
    %v89 = vmul.f32 %v79, %v79
    %v90 = vmul.f32 %v88, %v88
    %v91 = vadd.f32 %v89, %v90
    %92 = vset.pattern.permute.xlu0 2
    %93 = vperm.xlu0 %92, %v68
    %v94 = vpop.permute.xlu0 %93
    %v96 = vlaneseq
    %v97 = vshrl.u32 %v96, 7
    %v98 = vsub.s32 2, %v97
    %v99 = vrot.slane %v69, %v98
    %vm100 = vcmp.ne.f32.partialorder %v94, %v99
    %v101 = vsel %vm100, 1, 0
    %v102 = vcvt.s32.f32 %v101
    %v103 = vmul.f32 %v91, 0.25
    %v104 = vmul.f32 %v102, 3.9999995
    %v105 = vadd.f32 %v103, %v104
    %v106 = vsub.f32 0.0, %v105
    %v107 = vmul.f32 %v106, 1.442695
    %v108 = vpow.pop %v107
    %vm109 = vcmask 64512
    %110 = vst.msk [vmem:[#allocation9] sm:$0xff] %vm109, %v108
    %v111 = vsel %vm109, %v108, 0.0
    %112 = vadd.xlane.f32.xlu0 %v111
    %v113 = vpop.xlane.xlu0 %112
    %vm114 = vcmask 7168
    %115 = vst.msk [vmem:[%s9] sm:$0xff] %vm114, %v113
    %v116 = vld [vmem:[%s2] sm:$0xff]
    %v117 = vld [vmem:[#allocation2] sm:$0xff]
    %v118 = vld [vmem:[#allocation5] sm:$0xff]
    %v119 = vld [vmem:[%s5] sm:$0xff]
    %v120 = vld [vmem:[%s5 + $0x8] sm:$0xff]
    %v121 = vld [vmem:[#allocation7] sm:$0xff]
    %v122 = vld [vmem:[#allocation7 + $0x8] sm:$0xff]
    %v123 = vld [vmem:[#allocation7 + $0x10] sm:$0xff]
    %v124 = vld [vmem:[#allocation7 + $0x18] sm:$0xff]
    %v125 = vld [vmem:[#allocation7 + $0x20] sm:$0xff]
    %v126 = vld [vmem:[#allocation7 + $0x28] sm:$0xff]
    %v127 = vld [vmem:[#allocation7 + $0x30] sm:$0xff]
    %v128 = vld [vmem:[#allocation7 + $0x38] sm:$0xff]
    %v129 = vld [vmem:[#allocation7 + $0x40] sm:$0xff]
    %v130 = vld [vmem:[#allocation7 + $0x48] sm:$0xff]
    %v131 = vld [vmem:[#allocation7 + $0x50] sm:$0xff]
    %v132 = vld [vmem:[#allocation7 + $0x58] sm:$0xff]
    %v133 = vld [vmem:[#allocation7 + $0x60] sm:$0xff]
    %v134 = vld [vmem:[#allocation7 + $0x68] sm:$0xff]
    %v135 = vld [vmem:[#allocation7 + $0x70] sm:$0xff]
    %v136 = vld [vmem:[#allocation7 + $0x78] sm:$0xff]
    %v138 = vsel %vm109, %v108, 0
    %140 = vmatprep.subr.mxu0 0.0
    %141 = vmatpush1.msra.mxu0 %v118
    %142 = vmatprep.subr.mxu0 0.0
    %143 = vmatpush1.msra.mxu0 0.0
    %144 = vmatprep.subr.mxu0 0.0
    %145 = vmatpush1.msra.mxu0 0.0
    %146 = vmatprep.subr.mxu0 0.0
    %147 = vmatpush1.msra.mxu0 0.0
    %148 = vmatprep.subr.mxu0 0.0
    %149 = vmatpush1.msra.mxu0 0.0
    %150 = vmatprep.subr.mxu0 0.0
    %151 = vmatpush1.msra.mxu0 0.0
    %152 = vmatprep.subr.mxu0 0.0
    %153 = vmatpush1.msra.mxu0 0.0
    %154 = vmatprep.subr.mxu0 0.0
    %155 = vmatpush1.msra.mxu0 0.0
    %156 = vmatprep.subr.mxu0 0.0
    %157 = vmatpush1.msra.mxu0 0.0
    %158 = vmatprep.subr.mxu0 0.0
    %159 = vmatpush1.msra.mxu0 0.0
    %160 = vmatprep.subr.mxu0 0.0
    %161 = vmatpush1.msra.mxu0 0.0
    %162 = vmatprep.subr.mxu0 0.0
    %163 = vmatpush1.msra.mxu0 0.0
    %164 = vmatprep.subr.mxu0 0.0
    %165 = vmatpush1.msra.mxu0 0.0
    %166 = vmatprep.subr.mxu0 0.0
    %167 = vmatpush1.msra.mxu0 0.0
    %168 = vmatprep.subr.mxu0 0.0
    %169 = vmatpush1.msra.mxu0 0.0
    %170 = vmatprep.subr.mxu0 0.0
    %171 = vmatpush1.msra.mxu0 0.0
    %172 = vmatprep.subr.mxu0 0.0
    %173 = vmatpush1.msra.mxu0 0.0
    %174 = vmatprep.subr.mxu0 0.0
    %175 = vmatpush1.msra.mxu0 0.0
    %176 = vmatprep.subr.mxu0 0.0
    %177 = vmatpush1.msra.mxu0 0.0
    %178 = vmatprep.subr.mxu0 0.0
    %179 = vmatpush1.msra.mxu0 0.0
    %180 = vmatprep.subr.mxu0 0.0
    %181 = vmatpush1.msra.mxu0 0.0
    %182 = vmatprep.subr.mxu0 0.0
    %183 = vmatpush1.msra.mxu0 0.0
    %184 = vmatprep.subr.mxu0 0.0
    %185 = vmatpush1.msra.mxu0 0.0
    %186 = vmatprep.subr.mxu0 0.0
    %187 = vmatpush1.msra.mxu0 0.0
    %188 = vmatprep.subr.mxu0 0.0
    %189 = vmatpush1.msra.mxu0 0.0
    %190 = vmatprep.subr.mxu0 0.0
    %191 = vmatpush1.msra.mxu0 0.0
    %192 = vmatprep.subr.mxu0 0.0
    %193 = vmatpush1.msra.mxu0 0.0
    %194 = vmatprep.subr.mxu0 0.0
    %195 = vmatpush1.msra.mxu0 0.0
    %196 = vmatprep.subr.mxu0 0.0
    %197 = vmatpush1.msra.mxu0 0.0
    %198 = vmatprep.subr.mxu0 0.0
    %199 = vmatpush1.msra.mxu0 0.0
    %200 = vmatprep.subr.mxu0 0.0
    %201 = vmatpush1.msra.mxu0 0.0
    %202 = vmatprep.subr.mxu0 0.0
    %203 = vmatpush1.msra.mxu0 0.0
    %204 = vmatprep.mubr.f32.mxu0 0.0
    %205 = vmatmul.mubr.f32.gmra.mrb[0].mxu0 %v138
    %v206 = vpop.f32.mrb[0].mxu0
    %v207 = vadd.f32 0.0, %v206
    %v208 = vpop.f32.mrb[0].mxu0
    %209 = vdwg.mxu0
    %v210 = vmul.f32 %v207, 0.1
    %vm211 = vcmask 130048
    %v213 = vsel %vm211, %v116, 0
    %215 = vmatprep.subr.mxu0 0.0
    %216 = vmatpush1.msra.mxu0 %v119
    %217 = vmatprep.subr.mxu0 0.0
    %218 = vmatpush1.msra.mxu0 %v120
    %219 = vmatprep.subr.mxu0 0.0
    %220 = vmatpush1.msra.mxu0 0.0
    %221 = vmatprep.subr.mxu0 0.0
    %222 = vmatpush1.msra.mxu0 0.0
    %223 = vmatprep.subr.mxu0 0.0
    %224 = vmatpush1.msra.mxu0 0.0
    %225 = vmatprep.subr.mxu0 0.0
    %226 = vmatpush1.msra.mxu0 0.0
    %227 = vmatprep.subr.mxu0 0.0
    %228 = vmatpush1.msra.mxu0 0.0
    %229 = vmatprep.subr.mxu0 0.0
    %230 = vmatpush1.msra.mxu0 0.0
    %231 = vmatprep.subr.mxu0 0.0
    %232 = vmatpush1.msra.mxu0 0.0
    %233 = vmatprep.subr.mxu0 0.0
    %234 = vmatpush1.msra.mxu0 0.0
    %235 = vmatprep.subr.mxu0 0.0
    %236 = vmatpush1.msra.mxu0 0.0
    %237 = vmatprep.subr.mxu0 0.0
    %238 = vmatpush1.msra.mxu0 0.0
    %239 = vmatprep.subr.mxu0 0.0
    %240 = vmatpush1.msra.mxu0 0.0
    %241 = vmatprep.subr.mxu0 0.0
    %242 = vmatpush1.msra.mxu0 0.0
    %243 = vmatprep.subr.mxu0 0.0
    %244 = vmatpush1.msra.mxu0 0.0
    %245 = vmatprep.subr.mxu0 0.0
    %246 = vmatpush1.msra.mxu0 0.0
    %247 = vmatprep.subr.mxu0 0.0
    %248 = vmatpush1.msra.mxu0 0.0
    %249 = vmatprep.subr.mxu0 0.0
    %250 = vmatpush1.msra.mxu0 0.0
    %251 = vmatprep.subr.mxu0 0.0
    %252 = vmatpush1.msra.mxu0 0.0
    %253 = vmatprep.subr.mxu0 0.0
    %254 = vmatpush1.msra.mxu0 0.0
    %255 = vmatprep.subr.mxu0 0.0
    %256 = vmatpush1.msra.mxu0 0.0
    %257 = vmatprep.subr.mxu0 0.0
    %258 = vmatpush1.msra.mxu0 0.0
    %259 = vmatprep.subr.mxu0 0.0
    %260 = vmatpush1.msra.mxu0 0.0
    %261 = vmatprep.subr.mxu0 0.0
    %262 = vmatpush1.msra.mxu0 0.0
    %263 = vmatprep.subr.mxu0 0.0
    %264 = vmatpush1.msra.mxu0 0.0
    %265 = vmatprep.subr.mxu0 0.0
    %266 = vmatpush1.msra.mxu0 0.0
    %267 = vmatprep.subr.mxu0 0.0
    %268 = vmatpush1.msra.mxu0 0.0
    %269 = vmatprep.subr.mxu0 0.0
    %270 = vmatpush1.msra.mxu0 0.0
    %271 = vmatprep.subr.mxu0 0.0
    %272 = vmatpush1.msra.mxu0 0.0
    %273 = vmatprep.subr.mxu0 0.0
    %274 = vmatpush1.msra.mxu0 0.0
    %275 = vmatprep.subr.mxu0 0.0
    %276 = vmatpush1.msra.mxu0 0.0
    %277 = vmatprep.subr.mxu0 0.0
    %278 = vmatpush1.msra.mxu0 0.0
    %279 = vmatprep.mubr.f32.mxu0 0.0
    %280 = vmatmul.mubr.f32.gmra.mrb[0].mxu0 %v213
    %v281 = vpop.f32.mrb[0].mxu0
    %v282 = vadd.f32 %v210, %v281
    %v283 = vpop.f32.mrb[0].mxu0
    %284 = vdwg.mxu0
    %v285 = vadd.f32 %v282, 0.4
    %286 = vadd.xlane.f32.xlu0 %v117
    %v287 = vpop.xlane.xlu0 %286
    %v288 = vmul.f32 %v113, %v117
    %v289 = vmul.f32 %v288, 0.1
    %290 = vmatprep.subr.mxu0 0.0
    %291 = vmatpush1.msra.mxu0 %v121
    %292 = vmatprep.subr.mxu0 0.0
    %293 = vmatpush1.msra.mxu0 %v122
    %294 = vmatprep.subr.mxu0 0.0
    %295 = vmatpush1.msra.mxu0 %v123
    %296 = vmatprep.subr.mxu0 0.0
    %297 = vmatpush1.msra.mxu0 %v124
    %298 = vmatprep.subr.mxu0 0.0
    %299 = vmatpush1.msra.mxu0 %v125
    %300 = vmatprep.subr.mxu0 0.0
    %301 = vmatpush1.msra.mxu0 %v126
    %302 = vmatprep.subr.mxu0 0.0
    %303 = vmatpush1.msra.mxu0 %v127
    %304 = vmatprep.subr.mxu0 0.0
    %305 = vmatpush1.msra.mxu0 %v128
    %306 = vmatprep.subr.mxu0 0.0
    %307 = vmatpush1.msra.mxu0 %v129
    %308 = vmatprep.subr.mxu0 0.0
    %309 = vmatpush1.msra.mxu0 %v130
    %310 = vmatprep.subr.mxu0 0.0
    %311 = vmatpush1.msra.mxu0 %v131
    %312 = vmatprep.subr.mxu0 0.0
    %313 = vmatpush1.msra.mxu0 %v132
    %314 = vmatprep.subr.mxu0 0.0
    %315 = vmatpush1.msra.mxu0 %v133
    %316 = vmatprep.subr.mxu0 0.0
    %317 = vmatpush1.msra.mxu0 %v134
    %318 = vmatprep.subr.mxu0 0.0
    %319 = vmatpush1.msra.mxu0 %v135
    %320 = vmatprep.subr.mxu0 0.0
    %321 = vmatpush1.msra.mxu0 %v136
    %322 = vmatprep.subr.mxu0 0.0
    %323 = vmatpush1.msra.mxu0 0.0
    %324 = vmatprep.subr.mxu0 0.0
    %325 = vmatpush1.msra.mxu0 0.0
    %326 = vmatprep.subr.mxu0 0.0
    %327 = vmatpush1.msra.mxu0 0.0
    %328 = vmatprep.subr.mxu0 0.0
    %329 = vmatpush1.msra.mxu0 0.0
    %330 = vmatprep.subr.mxu0 0.0
    %331 = vmatpush1.msra.mxu0 0.0
    %332 = vmatprep.subr.mxu0 0.0
    %333 = vmatpush1.msra.mxu0 0.0
    %334 = vmatprep.subr.mxu0 0.0
    %335 = vmatpush1.msra.mxu0 0.0
    %336 = vmatprep.subr.mxu0 0.0
    %337 = vmatpush1.msra.mxu0 0.0
    %338 = vmatprep.subr.mxu0 0.0
    %339 = vmatpush1.msra.mxu0 0.0
    %340 = vmatprep.subr.mxu0 0.0
    %341 = vmatpush1.msra.mxu0 0.0
    %342 = vmatprep.subr.mxu0 0.0
    %343 = vmatpush1.msra.mxu0 0.0
    %344 = vmatprep.subr.mxu0 0.0
    %345 = vmatpush1.msra.mxu0 0.0
    %346 = vmatprep.subr.mxu0 0.0
    %347 = vmatpush1.msra.mxu0 0.0
    %348 = vmatprep.subr.mxu0 0.0
    %349 = vmatpush1.msra.mxu0 0.0
    %350 = vmatprep.subr.mxu0 0.0
    %351 = vmatpush1.msra.mxu0 0.0
    %352 = vmatprep.subr.mxu0 0.0
    %353 = vmatpush1.msra.mxu0 0.0
    %354 = vmatprep.mubr.f32.mxu0 0.0
    %355 = vmatmul.mubr.f32.gmra.mrb[0].mxu0 %v117
    %v356 = vpop.f32.mrb[0].mxu0
    %v357 = vadd.f32 %v289, %v356
    %v358 = vpop.f32.mrb[0].mxu0
    %359 = vdwg.mxu0
    %v360 = vmul.f32 %v287, 0.4
    %v361 = vadd.f32 %v357, %v360
    %v362 = vadd.f32 %v361, 1.1920929e-07
    %v363 = vrcp.pop %v362
    %v364 = vmul.f32 %v285, %v363
    %v365 = vmul.f32 %v117, %v364
    %vm366 = vcmp.lt.f32.partialorder %v365, 0.001
    %v367 = vsel %vm366, 0.0, %v365
    %368 = vadd.xlane.f32.xlu0 %v367
    %v369 = vpop.xlane.xlu0 %368
    %v370 = vrcp.pop %v369
    %v371 = vmul.f32 %v367, %v370
    %372 = vst [vmem:[#allocation8] sm:$0xff] %v371
    // Predicated region
    $region42: #{tpu_custom_call.1} parent=1 // pred_check
      _
    $region43: #{tpu_custom_call.1} parent=1 // pred_check_branch
      %374 = sbr.rel (0) target = $region45
    $region44: #{tpu_custom_call.1} parent=1 // pred_region
      %s376 = ssub.s32 128, 128
      %377 = vsyncadd [#allocation4], %s376
      %s379 = sshll.u32 [#allocation8], 4
      %s380 = int_to_ptr.vmem [resolvable:$true] %s379
      %382 = dma.vmem_to_hbm [thread:$0]  %s380, 128, %s7, [#allocation4]
    $region45: #{tpu_custom_call.1} parent=1 // pred_fallthru
      _
    // Predicated region
    $region46: #{tpu_custom_call.1} parent=1 // pred_check
      _
    $region47: #{tpu_custom_call.1} parent=1 // pred_check_branch
      %384 = sbr.rel (0) target = $region49
    $region48: #{tpu_custom_call.1} parent=1 // pred_region
      %s386 = ssub.s32 128, 128
      %387 = vsyncadd [#allocation10], %s386
      %s389 = sshll.u32 [#allocation9], 4
      %s390 = int_to_ptr.vmem [resolvable:$true] %s389
      %392 = dma.vmem_to_hbm [thread:$0]  %s390, 128, %s8, [#allocation10]
    $region49: #{tpu_custom_call.1} parent=1 // pred_fallthru
      _
    // Predicated region
    $region50: #{tpu_custom_call.1} parent=1 // pred_check
      _
    $region51: #{tpu_custom_call.1} parent=1 // pred_check_branch
      %394 = sbr.rel (0) target = $region53
    $region52: #{tpu_custom_call.1} parent=1 // pred_region
      _
    $region53: #{tpu_custom_call.1} parent=1 // pred_fallthru
      _
    // Predicated region
    $region54: #{tpu_custom_call.1} parent=1 // pred_check
      _
    $region55: #{tpu_custom_call.1} parent=1 // pred_check_branch
      %396 = sbr.rel (0) target = $region57
    $region56: #{tpu_custom_call.1} parent=1 // pred_region
      %397 = dma.done [#allocation4], 128
    $region57: #{tpu_custom_call.1} parent=1 // pred_fallthru
      _
    // Predicated region
    $region58: #{tpu_custom_call.1} parent=1 // pred_check
      _
    $region59: #{tpu_custom_call.1} parent=1 // pred_check_branch
      %399 = sbr.rel (0) target = $region61
    $region60: #{tpu_custom_call.1} parent=1 // pred_region
      %400 = dma.done [#allocation10], 128
    $region61: #{tpu_custom_call.1} parent=1 // pred_fallthru
      _
    // Predicated region
    $region62: #{tpu_custom_call.1} parent=1 // pred_check
      _
    $region63: #{tpu_custom_call.1} parent=1 // pred_check_branch
      %402 = sbr.rel (0) target = $region65
    $region64: #{tpu_custom_call.1} parent=1 // pred_region
      _
    $region65: #{tpu_custom_call.1} parent=1 // pred_fallthru
      _
    %403 = vsyncpa [#allocation3], 1
    %404 = vsyncpa [#allocation6], 1
    %405 = vsyncpa [#allocation4], 1
    %406 = vsyncpa [#allocation10], 1

</llo_original>
